<compile_context>
chip_gen: v5e
topology: v5e:2x2
jax: 0.10.0
libtpu: 0.0.40
codegen_flags: <defaults>
</compile_context>

<pallas_src>
import functools

import jax
import jax.numpy as jnp
from jax.experimental import pallas as pl
from jax.experimental.pallas import tpu as pltpu

_LANE = 128  # vreg lane width: last dim of the *output* kept a multiple of this


def _round_up(n: int, m: int) -> int:
    return ((n + m - 1) // m) * m


def _fused_mlp_kernel(*refs):
    """refs = (x, w_0, ..., w_{L-1}, bias_pack, out).

    All refs are full-array VMEM tiles; the whole chain of
    dot -> bias -> ReLU runs without leaving on-chip memory.
    """
    x_ref = refs[0]
    o_ref = refs[-1]
    b_ref = refs[-2]          # (L, pack_width) f32, row i = bias of layer i
    w_refs = refs[1:-2]
    num_layers = len(w_refs)

    h = x_ref[...].astype(jnp.float32)
    for i in range(num_layers):
        w = w_refs[i][...]                 # (K_i, N_i), possibly bf16
        n = w.shape[1]
        b = b_ref[i:i + 1, :n]             # (1, N_i) f32, broadcasts over rows
        # MXU matmul (operands in w.dtype, f32 accumulation); bias + ReLU on
        # the VPU in f32.
        h = jnp.dot(h.astype(w.dtype), w, preferred_element_type=jnp.float32) + b
        if i != num_layers - 1:
            h = jnp.maximum(h, 0.0)
            # Dropout (inference / eval mode): identity, no-op.
    o_ref[...] = h.astype(o_ref.dtype)


def init_mlp_params(key, input_size, hidden_sizes, num_classes):
    """Deterministic init mimicking nn.Linear's uniform(-1/sqrt(fan_in), +).

    Weights are stored transposed, (in_features, out_features), so the kernel
    computes x @ W + b (== PyTorch x @ W_pt.T + b)."""
    sizes = [input_size] + list(hidden_sizes) + [num_classes]
    params = []
    for i in range(len(sizes) - 1):
        fan_in, fan_out = sizes[i], sizes[i + 1]
        key, kw, kb = jax.random.split(key, 3)
        bound = 1.0 / jnp.sqrt(jnp.float32(fan_in))
        w = jax.random.uniform(kw, (fan_in, fan_out), jnp.float32, -bound, bound)
        b = jax.random.uniform(kb, (fan_out,), jnp.float32, -bound, bound)
        params.append((w, b))
    return params


def prepare_params(params, param_dtype=jnp.float32):
    """One-time parameter prep (off the hot path).

    * Weights stay UNPADDED in their inner dims (no DMA-byte inflation).
    * Only the last layer's N is zero-padded to a multiple of 128 lanes so the
      output store is an unmasked vst; the zero pad columns + zero pad bias
      keep padded logits at exactly 0.
    * Biases are packed into a single (L, pack_width) f32 array.
    * Weights optionally cast to bf16 (v6e/v7x MXU-native; halves DMA bytes).
    """
    num_layers = len(params)
    widths = [w.shape[1] for w, _ in params]
    widths[-1] = _round_up(widths[-1], _LANE)          # lane-dense final output
    pack_width = _round_up(max(widths), _LANE)

    weights = []
    bias_pack = jnp.zeros((num_layers, pack_width), jnp.float32)
    for i, (w, b) in enumerate(params):
        n = w.shape[1]
        if i == num_layers - 1 and widths[-1] != n:
            w = jnp.zeros((w.shape[0], widths[-1]), w.dtype).at[:, :n].set(w)
        weights.append(w.astype(param_dtype))
        bias_pack = bias_pack.at[i, :n].set(b.astype(jnp.float32))
    return tuple(weights), bias_pack


@functools.partial(jax.jit, static_argnames=("num_classes", "block_m"))
def mlp_forward_fused(x, prepared, num_classes, block_m=256):
    """Fused forward: single pallas_call -> slice padded logit columns."""
    weights, bias_pack = prepared
    batch, in_features = x.shape
    n_last_pad = weights[-1].shape[1]
    param_inputs = list(weights) + [bias_pack]

    if batch > block_m and batch % block_m == 0:
        # Large-batch path: grid over M, "parallel" so v7x's 2 TCs split rows.
        grid = (batch // block_m,)
        in_specs = [pl.BlockSpec((block_m, in_features), lambda i: (i, 0))]
        in_specs += [pl.BlockSpec(a.shape, lambda i: (0, 0)) for a in param_inputs]
        out_specs = pl.BlockSpec((block_m, n_last_pad), lambda i: (i, 0))
        extra = dict(
            grid=grid,
            compiler_params=pltpu.CompilerParams(dimension_semantics=("parallel",)),
        )
    else:
        # Toy/serving path: single invocation, everything resident at once.
        in_specs = [pl.BlockSpec((batch, in_features), lambda: (0, 0))]
        in_specs += [pl.BlockSpec(a.shape, lambda: (0, 0)) for a in param_inputs]
        out_specs = pl.BlockSpec((batch, n_last_pad), lambda: (0, 0))
        extra = {}

    out_pad = pl.pallas_call(
        _fused_mlp_kernel,
        out_shape=jax.ShapeDtypeStruct((batch, n_last_pad), x.dtype),
        in_specs=in_specs,
        out_specs=out_specs,
        **extra,
    )(x, *param_inputs)

    # Padded logit columns are exactly 0; slice them off here.  If a consumer
    # can read the padded logits directly (softmax/argmax over :num_classes),
    # drop this slice and fill pad columns with -inf inside the kernel.
    return out_pad[:, :num_classes]


if __name__ == "__main__":
    # Small shapes consistent with the module: batch=8, input=32,
    # hidden=[64, 32], classes=8.
    batch = 8
    input_size = 32
    hidden_sizes = [64, 32]
    num_classes = 8
    dropout_rate = 0.5  # unused at inference (eval-mode identity)

    key = jax.random.PRNGKey(0)
    key, kx = jax.random.split(key)
    x = jax.random.normal(kx, (batch, input_size), jnp.float32)

    params = init_mlp_params(key, input_size, hidden_sizes, num_classes)

    def reference(xin):
        h = xin
        for i, (w, b) in enumerate(params):
            h = h @ w + b
            if i != len(params) - 1:
                h = jnp.maximum(h, 0.0)
        return h

    # 1) f32 params: exact parity with the PyTorch f32 module.
    prepared_f32 = prepare_params(params, jnp.float32)
    out = mlp_forward_fused(x, prepared_f32, num_classes=num_classes, block_m=256)
    out = jax.block_until_ready(out)
    ref = reference(x)
    assert out.shape == (batch, num_classes)
    assert jnp.allclose(out, ref, atol=1e-5, rtol=1e-5)

    # 2) bf16 weights (v6e/v7x MXU-native) — tolerance loosened as flagged in
    #    the review, since operands are rounded to bf16.
    prepared_bf16 = prepare_params(params, jnp.bfloat16)
    out_bf16 = mlp_forward_fused(x, prepared_bf16, num_classes=num_classes, block_m=256)
    out_bf16 = jax.block_until_ready(out_bf16)
    assert jnp.allclose(out_bf16, ref, atol=2e-1, rtol=2e-1)

    # 3) Larger batch exercising the M-grid "parallel" path (v7x 2-TC split).
    key, kb = jax.random.split(key)
    x_big = jax.random.normal(kb, (512, input_size), jnp.float32)
    out_big = mlp_forward_fused(x_big, prepared_f32, num_classes=num_classes, block_m=256)
    out_big = jax.block_until_ready(out_big)
    assert out_big.shape == (512, num_classes)
    assert jnp.allclose(out_big, reference(x_big), atol=1e-5, rtol=1e-5)

    print("KERNEL_OK")
</pallas_src>

<mosaic_0001>
module attributes {stable_mosaic.version = 11 : i64} {
  func.func @_fused_mlp_kernel(%arg0: memref<8x32xf32, #tpu.memory_space<vmem>>, %arg1: memref<32x64xf32, #tpu.memory_space<vmem>>, %arg2: memref<64x32xf32, #tpu.memory_space<vmem>>, %arg3: memref<32x128xf32, #tpu.memory_space<vmem>>, %arg4: memref<3x128xf32, #tpu.memory_space<vmem>>, %arg5: memref<8x128xf32, #tpu.memory_space<vmem>>) attributes {dimension_semantics = [], scalar_prefetch = 0 : i64, scratch_operands = 0 : i64, tpu.core_type = #tpu.core_type<tc>} {
    %c0 = arith.constant 0 : index
    %c0_0 = arith.constant 0 : index
    %0 = vector.load %arg0[%c0, %c0_0] : memref<8x32xf32, #tpu.memory_space<vmem>>, vector<8x32xf32>
    %c0_1 = arith.constant 0 : index
    %c0_2 = arith.constant 0 : index
    %1 = vector.load %arg1[%c0_1, %c0_2] : memref<32x64xf32, #tpu.memory_space<vmem>>, vector<32x64xf32>
    %c0_3 = arith.constant 0 : index
    %c0_4 = arith.constant 0 : index
    %2 = vector.load %arg4[%c0_3, %c0_4] : memref<3x128xf32, #tpu.memory_space<vmem>>, vector<1x64xf32>
    %cst = arith.constant dense<0.000000e+00> : vector<8x64xf32>
    %3 = tpu.matmul %0, %1, %cst {dimension_numbers = #tpu.dot_dimension_numbers<[1], [0], [0], [1], [0, 0, 1, 1], [], []>} : vector<8x32xf32>, vector<32x64xf32>, vector<8x64xf32> -> vector<8x64xf32>
    %4 = vector.broadcast %2 : vector<1x64xf32> to vector<8x64xf32>
    %5 = arith.addf %3, %4 : vector<8x64xf32>
    %cst_5 = arith.constant 0.000000e+00 : f32
    %6 = vector.broadcast %cst_5 : f32 to vector<8x64xf32>
    %7 = arith.maximumf %5, %6 : vector<8x64xf32>
    %c0_6 = arith.constant 0 : index
    %c0_7 = arith.constant 0 : index
    %8 = vector.load %arg2[%c0_6, %c0_7] : memref<64x32xf32, #tpu.memory_space<vmem>>, vector<64x32xf32>
    %c1 = arith.constant 1 : index
    %c0_8 = arith.constant 0 : index
    %9 = vector.load %arg4[%c1, %c0_8] : memref<3x128xf32, #tpu.memory_space<vmem>>, vector<1x32xf32>
    %cst_9 = arith.constant dense<0.000000e+00> : vector<8x32xf32>
    %10 = tpu.matmul %7, %8, %cst_9 {dimension_numbers = #tpu.dot_dimension_numbers<[1], [0], [0], [1], [0, 0, 1, 1], [], []>} : vector<8x64xf32>, vector<64x32xf32>, vector<8x32xf32> -> vector<8x32xf32>
    %11 = vector.broadcast %9 : vector<1x32xf32> to vector<8x32xf32>
    %12 = arith.addf %10, %11 : vector<8x32xf32>
    %cst_10 = arith.constant 0.000000e+00 : f32
    %13 = vector.broadcast %cst_10 : f32 to vector<8x32xf32>
    %14 = arith.maximumf %12, %13 : vector<8x32xf32>
    %c0_11 = arith.constant 0 : index
    %c0_12 = arith.constant 0 : index
    %15 = vector.load %arg3[%c0_11, %c0_12] : memref<32x128xf32, #tpu.memory_space<vmem>>, vector<32x128xf32>
    %c2 = arith.constant 2 : index
    %c0_13 = arith.constant 0 : index
    %16 = vector.load %arg4[%c2, %c0_13] : memref<3x128xf32, #tpu.memory_space<vmem>>, vector<1x128xf32>
    %cst_14 = arith.constant dense<0.000000e+00> : vector<8x128xf32>
    %17 = tpu.matmul %14, %15, %cst_14 {dimension_numbers = #tpu.dot_dimension_numbers<[1], [0], [0], [1], [0, 0, 1, 1], [], []>} : vector<8x32xf32>, vector<32x128xf32>, vector<8x128xf32> -> vector<8x128xf32>
    %18 = vector.broadcast %16 : vector<1x128xf32> to vector<8x128xf32>
    %19 = arith.addf %17, %18 : vector<8x128xf32>
    %c0_15 = arith.constant 0 : index
    %c0_16 = arith.constant 0 : index
    %20 = vector.load %arg5[%c0_15, %c0_16] : memref<8x128xf32, #tpu.memory_space<vmem>>, vector<8x128xf32>
    tpu.vector_store %arg5[%c0_15, %c0_16], %19 {strides = array<i32>} : memref<8x128xf32, #tpu.memory_space<vmem>>, vector<8x128xf32>,
    return
  }
}

</mosaic_0001>

<llo_original>
// kernel: mlp_forward_fused.1
$region0: #{mlp_forward_fused.1}
  #allocation0 [shape = 'u32[]', space=smem, size = 0x4, offset = 0x4, fixed_abs, tag = 'smem constant byte address 0x4 - core index']
  #allocation1 [shape = 'u32[72,128]{1,0:T(1,128)}', space=vmem, size = 0x9000, scoped, tag = 'internal scratch']
  %s0 = inlined_call_operand.vmem [shape: f32[8,32], index: 0, kind: input, shape index: {}]
  %s1 = inlined_call_operand.vmem [shape: f32[32,64], index: 1, kind: input, shape index: {}]
  %s2 = inlined_call_operand.vmem [shape: f32[64,32], index: 2, kind: input, shape index: {}]
  %s3 = inlined_call_operand.vmem [shape: f32[32,128], index: 3, kind: input, shape index: {}]
  %s4 = inlined_call_operand.vmem [shape: f32[3,128], index: 4, kind: input, shape index: {}]
  %s5 = inlined_call_operand.hbm [shape: f32[8,128], index: 5, kind: output, shape index: {}]
  %s6 = sld [smem:[#allocation0]]
  $region30: #{mlp_forward_fused.1} parent=0
    _
  %s8 = ssub.s32 1, %s6
  %s9 = scalar_select 0, %s8, %s6
  $region1: #{mlp_forward_fused.1} parent=0
    #allocation2 [shape = 'u8[4096]{0}', space=vmem, size = 0x1000, scoped, tag = 'output window, operand 0, single buffered']
    #allocation3 [shape = 's32[1]{0}', space=sflag, size = 0x4, scoped, tag = 'scoped memory for mlp_forward_fused.1']
    %10 = vsyncpa [#allocation3], 0
    // Predicated region
    $region2: #{mlp_forward_fused.1} parent=1 // pred_check
      _
    $region3: #{mlp_forward_fused.1} parent=1 // pred_check_branch
      %12 = sbr.rel (0) target = $region5
    $region4: #{mlp_forward_fused.1} parent=1 // pred_region
      _
    $region5: #{mlp_forward_fused.1} parent=1 // pred_fallthru
      _
    // Predicated region
    $region6: #{mlp_forward_fused.1} parent=1 // pred_check
      _
    $region7: #{mlp_forward_fused.1} parent=1 // pred_check_branch
      %14 = sbr.rel (0) target = $region9
    $region8: #{mlp_forward_fused.1} parent=1 // pred_region
      _
    $region9: #{mlp_forward_fused.1} parent=1 // pred_fallthru
      _
    // Predicated region
    $region10: #{mlp_forward_fused.1} parent=1 // pred_check
      _
    $region11: #{mlp_forward_fused.1} parent=1 // pred_check_branch
      %16 = sbr.rel (0) target = $region13
    $region12: #{mlp_forward_fused.1} parent=1 // pred_region
      _
    $region13: #{mlp_forward_fused.1} parent=1 // pred_fallthru
      _
    // Predicated region
    $region14: #{mlp_forward_fused.1} parent=1 // pred_check
      _
    $region15: #{mlp_forward_fused.1} parent=1 // pred_check_branch
      %18 = sbr.rel (0) target = $region17
    $region16: #{mlp_forward_fused.1} parent=1 // pred_region
      _
    $region17: #{mlp_forward_fused.1} parent=1 // pred_fallthru
      _
    // Predicated region
    $region18: #{mlp_forward_fused.1} parent=1 // pred_check
      _
    $region19: #{mlp_forward_fused.1} parent=1 // pred_check_branch
      %20 = sbr.rel (0) target = $region21
    $region20: #{mlp_forward_fused.1} parent=1 // pred_region
      _
    $region21: #{mlp_forward_fused.1} parent=1 // pred_fallthru
      _
    %v21 = vld [vmem:[%s0] sm:$0xff]
    %v22 = vld [vmem:[%s1] sm:$0xff]
    %v23 = vld [vmem:[%s1 + $0x8] sm:$0xff]
    %v24 = vld [vmem:[%s1 + $0x10] sm:$0xff]
    %v25 = vld [vmem:[%s1 + $0x18] sm:$0xff]
    %v26 = vld [vmem:[%s4] sm:$0x1]
    %v27 = vperm.slane %v26, 0
    %vm28 = vcmask 261120
    %v30 = vsel %vm28, %v21, 0
    %32 = vmatpush.msra.mxu0 0.0
    %33 = vmatpush.msra.mxu0 0.0
    %34 = vmatpush.msra.mxu0 0.0
    %35 = vmatpush.msra.mxu0 0.0
    %36 = vmatpush.msra.mxu0 0.0
    %37 = vmatpush.msra.mxu0 0.0
    %38 = vmatpush.msra.mxu0 0.0
    %39 = vmatpush.msra.mxu0 0.0
    %40 = vmatpush.msra.mxu0 0.0
    %41 = vmatpush.msra.mxu0 0.0
    %42 = vmatpush.msra.mxu0 0.0
    %43 = vmatpush.msra.mxu0 0.0
    %44 = vmatpush.msra.mxu0 %v25
    %45 = vmatpush.msra.mxu0 %v24
    %46 = vmatpush.msra.mxu0 %v23
    %47 = vmatpush.msra.mxu0 %v22
    %48 = vmatmul.f32.gmra.mxu0 %v30
    %v49 = vpop.f32.mrf.mxu0
    %v50 = vadd.f32 %v27, %v49
    %51 = vdwg.mxu0
    %v52 = vmax.f32 %v50, 0.0
    %v53 = vld [vmem:[%s2] sm:$0xff]
    %v54 = vld [vmem:[%s2 + $0x8] sm:$0xff]
    %v55 = vld [vmem:[%s2 + $0x10] sm:$0xff]
    %v56 = vld [vmem:[%s2 + $0x18] sm:$0xff]
    %v57 = vld [vmem:[%s2 + $0x20] sm:$0xff]
    %v58 = vld [vmem:[%s2 + $0x28] sm:$0xff]
    %v59 = vld [vmem:[%s2 + $0x30] sm:$0xff]
    %v60 = vld [vmem:[%s2 + $0x38] sm:$0xff]
    %v61 = vld [vmem:[%s4 + $0x1] sm:$0x1]
    %v62 = vperm.slane %v61, 0
    %vm63 = vcmask 523264
    %v65 = vsel %vm63, %v52, 0
    %67 = vmatpush.msra.mxu0 0.0
    %68 = vmatpush.msra.mxu0 0.0
    %69 = vmatpush.msra.mxu0 0.0
    %70 = vmatpush.msra.mxu0 0.0
    %71 = vmatpush.msra.mxu0 0.0
    %72 = vmatpush.msra.mxu0 0.0
    %73 = vmatpush.msra.mxu0 0.0
    %74 = vmatpush.msra.mxu0 0.0
    %75 = vmatpush.msra.mxu0 %v60
    %76 = vmatpush.msra.mxu0 %v59
    %77 = vmatpush.msra.mxu0 %v58
    %78 = vmatpush.msra.mxu0 %v57
    %79 = vmatpush.msra.mxu0 %v56
    %80 = vmatpush.msra.mxu0 %v55
    %81 = vmatpush.msra.mxu0 %v54
    %82 = vmatpush.msra.mxu0 %v53
    %83 = vmatmul.f32.gmra.mxu0 %v65
    %v84 = vpop.f32.mrf.mxu0
    %v85 = vadd.f32 %v62, %v84
    %86 = vdwg.mxu0
    %v87 = vmax.f32 %v85, 0.0
    %v88 = vld [vmem:[%s3] sm:$0xff]
    %v89 = vld [vmem:[%s3 + $0x8] sm:$0xff]
    %v90 = vld [vmem:[%s3 + $0x10] sm:$0xff]
    %v91 = vld [vmem:[%s3 + $0x18] sm:$0xff]
    %v92 = vld [vmem:[%s4 + $0x2] sm:$0x1]
    %v93 = vperm.slane %v92, 0
    %v95 = vsel %vm28, %v87, 0
    %97 = vmatpush.msra.mxu0 0.0
    %98 = vmatpush.msra.mxu0 0.0
    %99 = vmatpush.msra.mxu0 0.0
    %100 = vmatpush.msra.mxu0 0.0
    %101 = vmatpush.msra.mxu0 0.0
    %102 = vmatpush.msra.mxu0 0.0
    %103 = vmatpush.msra.mxu0 0.0
    %104 = vmatpush.msra.mxu0 0.0
    %105 = vmatpush.msra.mxu0 0.0
    %106 = vmatpush.msra.mxu0 0.0
    %107 = vmatpush.msra.mxu0 0.0
    %108 = vmatpush.msra.mxu0 0.0
    %109 = vmatpush.msra.mxu0 %v91
    %110 = vmatpush.msra.mxu0 %v90
    %111 = vmatpush.msra.mxu0 %v89
    %112 = vmatpush.msra.mxu0 %v88
    %113 = vmatmul.f32.gmra.mxu0 %v95
    %v114 = vpop.f32.mrf.mxu0
    %v115 = vadd.f32 %v93, %v114
    %116 = vdwg.mxu0
    %117 = vst [vmem:[#allocation2] sm:$0xff] %v115
    // Predicated region
    $region22: #{mlp_forward_fused.1} parent=1 // pred_check
      _
    $region23: #{mlp_forward_fused.1} parent=1 // pred_check_branch
      %119 = sbr.rel (0) target = $region25
    $region24: #{mlp_forward_fused.1} parent=1 // pred_region
      %121 = vsyncadd [#allocation3], 0
      %s123 = sshll.u32 [#allocation2], 4
      %s124 = int_to_ptr.vmem [resolvable:$true] %s123
      %s125 = sshll.u32 %s5, 4
      %s126 = int_to_ptr.hbm [resolvable:$true] %s125
      %128 = dma.vmem_to_hbm [thread:$0]  %s124, 128, %s126, [#allocation3]
    $region25: #{mlp_forward_fused.1} parent=1 // pred_fallthru
      _
    // Predicated region
    $region26: #{mlp_forward_fused.1} parent=1 // pred_check
      _
    $region27: #{mlp_forward_fused.1} parent=1 // pred_check_branch
      %130 = sbr.rel (0) target = $region29
    $region28: #{mlp_forward_fused.1} parent=1 // pred_region
      %132 = dma.done [#allocation3], 128
    $region29: #{mlp_forward_fused.1} parent=1 // pred_fallthru
      _
    %133 = vsyncpa [#allocation3], 1

</llo_original>
